<compile_context>
chip_gen: v7x
topology: tpu7x:2x2x1
jax: 0.10.0
libtpu: 0.0.40
codegen_flags: <defaults>
</compile_context>

<pallas_src>
import math
from functools import partial

import jax
import jax.numpy as jnp
from jax.experimental import pallas as pl
from jax.experimental.pallas import tpu as pltpu


# ----------------------------------------------------------------------- elementwise
def _erf(x):
    # Abramowitz & Stegun 7.1.26 (|err| < 1.5e-7) ~ PyTorch exact-erf nn.GELU at f32.
    # The divide is routed to the EUP via approx reciprocal (VALU relief).
    a1, a2, a3, a4, a5 = 0.254829592, -0.284496736, 1.421413741, -1.453152027, 1.061405429
    p = 0.3275911
    s = jnp.where(x < 0.0, -1.0, 1.0)
    ax = jnp.abs(x)
    t = pl.reciprocal(1.0 + p * ax, approx=True)
    y = 1.0 - ((((a5 * t + a4) * t + a3) * t + a2) * t + a1) * t * jnp.exp(-ax * ax)
    return s * y


def _gelu(x):
    return 0.5 * x * (1.0 + _erf(x * (1.0 / math.sqrt(2.0))))


def _layernorm(x, g, b, eps):
    # x: (N, E) f32; g, b: (1, E) f32
    mu = jnp.mean(x, axis=-1, keepdims=True)
    var = jnp.mean((x - mu) ** 2, axis=-1, keepdims=True)
    return (x - mu) * jax.lax.rsqrt(var + eps) * g + b


def _full_spec(shape):
    nd = len(shape)
    return pl.BlockSpec(shape, lambda i, _n=nd: (0,) * _n)


# -------------------------------------------------------------------------- kernels
def patch_embed_kernel(p_ref, w_ref, b_ref, o_ref):
    # p_ref: (Tr, K) bf16   w_ref: (K, E) bf16   b_ref: (1, E) f32   o_ref: (Tr, E) bf16
    o_ref[...] = (jnp.dot(p_ref[...], w_ref[...], preferred_element_type=jnp.float32)
                  + b_ref[...]).astype(o_ref.dtype)


def block_kernel(x_ref, g1_ref, b1_ref, wqkv_ref, bqkv_ref, wproj_ref, bproj_ref,
                 g2_ref, b2_ref, w1_ref, bf1_ref, w2_ref, bf2_ref, o_ref, attn_ref,
                 *, num_heads):
    # x_ref: (1, N, E) bf16; weights bf16; LN params / biases f32; attn_ref: (N, E) bf16 scratch
    x = x_ref[0].astype(jnp.float32)                       # residual kept in f32
    N, E = x.shape
    D = E // num_heads
    scale = D ** -0.5

    h = _layernorm(x, g1_ref[...], b1_ref[...], 1e-6).astype(jnp.bfloat16)
    qkv = (jnp.dot(h, wqkv_ref[...], preferred_element_type=jnp.float32)
           + bqkv_ref[...]).astype(jnp.bfloat16)           # (N, 3E)

    for hh in range(num_heads):
        q = qkv[:, hh * D:(hh + 1) * D] * scale            # scale folded into q (N*D ops)
        k = qkv[:, E + hh * D:E + (hh + 1) * D]
        v = qkv[:, 2 * E + hh * D:2 * E + (hh + 1) * D]
        s = jax.lax.dot_general(q, k, (((1,), (1,)), ((), ())),
                                preferred_element_type=jnp.float32)     # (N, N)
        s = s - jnp.max(s, axis=-1, keepdims=True)
        p = jnp.exp(s)
        p = p * pl.reciprocal(jnp.sum(p, axis=-1, keepdims=True), approx=True)
        # write this head's output straight into the scratch slab (no lane concat,
        # bounded live ranges)
        attn_ref[:, hh * D:(hh + 1) * D] = jnp.dot(
            p.astype(jnp.bfloat16), v, preferred_element_type=jnp.float32
        ).astype(jnp.bfloat16)

    attn = jnp.dot(attn_ref[...], wproj_ref[...],
                   preferred_element_type=jnp.float32) + bproj_ref[...]
    x = x + attn
    h2 = _layernorm(x, g2_ref[...], b2_ref[...], 1e-6).astype(jnp.bfloat16)
    m = jnp.dot(h2, w1_ref[...], preferred_element_type=jnp.float32) + bf1_ref[...]
    m = _gelu(m).astype(jnp.bfloat16)
    m = jnp.dot(m, w2_ref[...], preferred_element_type=jnp.float32) + bf2_ref[...]
    o_ref[0] = (x + m).astype(o_ref.dtype)


def predictor_kernel(x_ref, pol_ref, g_ref, b_ref, wi_ref, bi_ref,
                     w1a_ref, w1b_ref, b1_ref, w2_ref, b2_ref, w3_ref, b3_ref, o_ref):
    x = x_ref[0].astype(jnp.float32)                       # (Ns, E)
    pol = pol_ref[0]                                       # (Ns, 1) f32
    C = x.shape[1]

    h = _layernorm(x, g_ref[...], b_ref[...], 1e-5)        # nn.LayerNorm default eps
    h = _gelu(jnp.dot(h.astype(jnp.bfloat16), wi_ref[...],
                      preferred_element_type=jnp.float32) + bi_ref[...])     # (Ns, C) f32

    local_x = h[:, :C // 2]
    gsum = jnp.sum(h[:, C // 2:] * pol, axis=0, keepdims=True)                # (1, C//2)
    inv_psum = pl.reciprocal(jnp.sum(pol, axis=0, keepdims=True), approx=True)
    global_x = gsum * inv_psum                                                # (1, C//2)

    # cat([local, broadcast(global)], -1) @ w1  ==  local @ w1[:C//2] + global @ w1[C//2:]
    z = (jnp.dot(local_x.astype(jnp.bfloat16), w1a_ref[...],
                 preferred_element_type=jnp.float32)
         + jnp.dot(global_x.astype(jnp.bfloat16), w1b_ref[...],
                   preferred_element_type=jnp.float32)
         + b1_ref[...])
    z = _gelu(z)
    z = _gelu(jnp.dot(z.astype(jnp.bfloat16), w2_ref[...],
                      preferred_element_type=jnp.float32) + b2_ref[...])
    z = jnp.dot(z.astype(jnp.bfloat16), w3_ref[...],
                preferred_element_type=jnp.float32) + b3_ref[...]             # (Ns, 2)
    zmax = jnp.max(z, axis=-1, keepdims=True)
    lse = jnp.log(jnp.sum(jnp.exp(z - zmax), axis=-1, keepdims=True)) + zmax
    o_ref[0] = z - lse                                     # LogSoftmax(dim=-1)


def head_kernel(cls_ref, g_ref, b_ref, wh_ref, bh_ref, o_ref):
    # cls_ref: (B, E) bf16 — only the cls rows are ever DMA'd into this kernel.
    h = _layernorm(cls_ref[...].astype(jnp.float32), g_ref[...], b_ref[...], 1e-6)
    o_ref[...] = jnp.dot(h.astype(jnp.bfloat16), wh_ref[...],
                         preferred_element_type=jnp.float32) + bh_ref[...]


# -------------------------------------------------------------------------- wrappers
_CP = pltpu.CompilerParams(dimension_semantics=("parallel",))
# Raised scoped-VMEM limit for the fused block kernel (weights kept fully resident;
# matters at real ViT sizes, harmless at the toy config).
_CP_BLOCK = pltpu.CompilerParams(dimension_semantics=("parallel",),
                                 vmem_limit_bytes=48 * 1024 * 1024)


def _pick_row_tile(rows, target=256):
    """Largest divisor of `rows` that is a multiple of 8 and <= target (else full)."""
    if rows % 8 != 0:
        return rows
    for cand in range(min(target, rows), 7, -8):
        if rows % cand == 0:
            return cand
    return rows


def patch_embed_apply(patches2d, w, b):
    # patches2d: (R, K) bf16 — gridded over 8-aligned row tiles, weight resident.
    R, K = patches2d.shape
    E = w.shape[1]
    tr = _pick_row_tile(R)
    return pl.pallas_call(
        patch_embed_kernel,
        out_shape=jax.ShapeDtypeStruct((R, E), jnp.bfloat16),
        grid=(R // tr,),
        in_specs=[pl.BlockSpec((tr, K), lambda i: (i, 0)),
                  _full_spec(w.shape), _full_spec(b.shape)],
        out_specs=pl.BlockSpec((tr, E), lambda i: (i, 0)),
        compiler_params=_CP,
    )(patches2d, w, b)


def block_apply(x, bp, num_heads):
    # TODO(synk): at real ViT sizes, tile the token dim (flash-style attention with an
    #             f32 accumulator) and the MLP contraction dim as extra grid axes so
    #             both v7x TensorCores + the DMA pipeline get >2 steps per block.
    B, N, E = x.shape
    ws = [bp['ln1_g'], bp['ln1_b'], bp['wqkv'], bp['bqkv'], bp['wproj'], bp['bproj'],
          bp['ln2_g'], bp['ln2_b'], bp['wfc1'], bp['bfc1'], bp['wfc2'], bp['bfc2']]
    return pl.pallas_call(
        partial(block_kernel, num_heads=num_heads),
        out_shape=jax.ShapeDtypeStruct((B, N, E), jnp.bfloat16),
        grid=(B,),
        in_specs=[pl.BlockSpec((1, N, E), lambda b: (b, 0, 0))] +
                 [_full_spec(w.shape) for w in ws],
        out_specs=pl.BlockSpec((1, N, E), lambda b: (b, 0, 0)),
        scratch_shapes=[pltpu.VMEM((N, E), jnp.bfloat16)],      # per-head output slab
        compiler_params=_CP_BLOCK,
    )(x, *ws)


def predictor_apply(x, policy, pp):
    B, Ns, E = x.shape
    ws = [pp['ln_g'], pp['ln_b'], pp['w_in'], pp['b_in'],
          pp['w1a'], pp['w1b'], pp['b1'], pp['w2'], pp['b2'], pp['w3'], pp['b3']]
    return pl.pallas_call(
        predictor_kernel,
        out_shape=jax.ShapeDtypeStruct((B, Ns, 2), jnp.float32),
        grid=(B,),
        in_specs=[pl.BlockSpec((1, Ns, E), lambda b: (b, 0, 0)),
                  pl.BlockSpec((1, Ns, 1), lambda b: (b, 0, 0))] +
                 [_full_spec(w.shape) for w in ws],
        out_specs=pl.BlockSpec((1, Ns, 2), lambda b: (b, 0, 0)),
        compiler_params=_CP,
    )(x, policy, *ws)


def head_apply(cls_tok, norm_g, norm_b, head_w, head_b):
    # Only the (B, E) cls rows are passed in (LayerNorm is per-token, so this is exact
    # for self.norm(x)[:, 0]) — cuts head-kernel input DMA by ~N x.
    B, E = cls_tok.shape
    NC = head_w.shape[1]
    return pl.pallas_call(
        head_kernel,
        out_shape=jax.ShapeDtypeStruct((B, NC), jnp.float32),
        grid=(1,),
        in_specs=[_full_spec((B, E)), _full_spec(norm_g.shape), _full_spec(norm_b.shape),
                  _full_spec(head_w.shape), _full_spec(head_b.shape)],
        out_specs=_full_spec((B, NC)),
        compiler_params=_CP,
    )(cls_tok, norm_g, norm_b, head_w, head_b)


# -------------------------------------------------------------------------- JAX glue
def extract_patches(x, ps):
    # NCHW -> (BF, num_patches, C*ps*ps), flattened in (C, kh, kw) order (== conv weight)
    BF, C, H, W = x.shape
    nh, nw = H // ps, W // ps
    x = x.reshape(BF, C, nh, ps, nw, ps)
    x = x.transpose(0, 2, 4, 1, 3, 5)                # (BF, nh, nw, C, ps, ps)
    return x.reshape(BF, nh * nw, C * ps * ps)


def batch_index_select(x, idx):
    if x.ndim == 3:
        B, N, C = x.shape
        Nn = idx.shape[1]
        offset = jnp.arange(B, dtype=idx.dtype)[:, None] * N
        flat = (idx + offset).reshape(-1)
        return x.reshape(B * N, C)[flat].reshape(B, Nn, C)
    elif x.ndim == 2:
        B, N = x.shape
        Nn = idx.shape[1]
        offset = jnp.arange(B, dtype=idx.dtype)[:, None] * N
        flat = (idx + offset).reshape(-1)
        return x.reshape(B * N)[flat].reshape(B, Nn)
    raise NotImplementedError


def init_params(key, *, embed_dim, depth, mlp_ratio, num_classes,
                in_chans, patch_size, num_patches, num_frames, num_pred):
    keys = list(jax.random.split(key, 128))
    it = iter(keys)

    def nrm(shape, std=0.02):
        return jax.random.normal(next(it), shape, jnp.float32) * std

    bf = jnp.bfloat16
    hidden = int(embed_dim * mlp_ratio)
    K = in_chans * patch_size * patch_size
    params = {
        # patch-embed conv weight pre-flattened to (C*ps*ps, E) matmul layout, bf16
        'patch_w2d': nrm((embed_dim, K)).T.astype(bf),
        'patch_b': jnp.zeros((1, embed_dim), jnp.float32),
        'cls_token': nrm((1, 1, embed_dim)),
        'pos_embed': nrm((1, num_patches * num_frames + 1, embed_dim)),
        'norm_g': jnp.ones((1, embed_dim), jnp.float32),
        'norm_b': jnp.zeros((1, embed_dim), jnp.float32),
        'head_w': nrm((num_classes, embed_dim)).T.astype(bf),        # (E, NC) bf16
        'head_b': jnp.zeros((1, num_classes), jnp.float32),
    }
    params['blocks'] = []
    for _ in range(depth):
        params['blocks'].append(dict(
            ln1_g=jnp.ones((1, embed_dim)), ln1_b=jnp.zeros((1, embed_dim)),
            wqkv=nrm((3 * embed_dim, embed_dim)).T.astype(bf), bqkv=jnp.zeros((1, 3 * embed_dim)),
            wproj=nrm((embed_dim, embed_dim)).T.astype(bf), bproj=jnp.zeros((1, embed_dim)),
            ln2_g=jnp.ones((1, embed_dim)), ln2_b=jnp.zeros((1, embed_dim)),
            wfc1=nrm((hidden, embed_dim)).T.astype(bf), bfc1=jnp.zeros((1, hidden)),
            wfc2=nrm((embed_dim, hidden)).T.astype(bf), bfc2=jnp.zeros((1, embed_dim)),
        ))
    params['predictors'] = []
    for _ in range(num_pred):
        w1 = nrm((embed_dim // 2, embed_dim)).T.astype(bf)           # (E, E//2)
        params['predictors'].append(dict(
            ln_g=jnp.ones((1, embed_dim)), ln_b=jnp.zeros((1, embed_dim)),
            w_in=nrm((embed_dim, embed_dim)).T.astype(bf), b_in=jnp.zeros((1, embed_dim)),
            w1a=w1[:embed_dim // 2], w1b=w1[embed_dim // 2:],        # local / global halves
            b1=jnp.zeros((1, embed_dim // 2)),
            w2=nrm((embed_dim // 4, embed_dim // 2)).T.astype(bf),
            b2=jnp.zeros((1, embed_dim // 4)),
            w3=nrm((2, embed_dim // 4)).T.astype(bf), b3=jnp.zeros((1, 2)),
        ))
    return params


def vit_prune_forward(x, params, *, num_frames, patch_size, num_heads,
                      depth, pruning_loc=(1, 3, 5)):
    # eval-mode forward (self.training == False); dropout / drop_path are identity.
    # TODO(synk): training branch (gumbel_softmax soft pruning + policy-masked attention)
    #             not implemented; only the inference top-k pruning path is reproduced.
    BF, C, H, W = x.shape
    B = BF // num_frames
    E = params['cls_token'].shape[-1]

    patches = extract_patches(x, patch_size).astype(jnp.bfloat16)    # (BF, Np, K)
    _, Np, K = patches.shape
    emb = patch_embed_apply(patches.reshape(BF * Np, K),
                            params['patch_w2d'], params['patch_b'])  # (BF*Np, E) bf16
    emb = emb.reshape(B, num_frames * Np, E)                         # '(b f) n e -> b (f n) e'

    cls = jnp.broadcast_to(params['cls_token'], (B, 1, E)).astype(jnp.bfloat16)
    xt = jnp.concatenate([cls, emb], axis=1)
    xt = (xt.astype(jnp.float32) + params['pos_embed']).astype(jnp.bfloat16)  # img 224: no interp

    base_rate = 0.7
    token_ratio = [base_rate, base_rate ** 2, base_rate ** 3]
    init_n = 14 * 14 * num_frames
    prev_decision = jnp.ones((B, init_n, 1), jnp.float32)

    p_count = 0
    for idx in range(depth):
        if idx in pruning_loc:
            spatial_x = xt[:, 1:]
            pred_score = predictor_apply(spatial_x, prev_decision,
                                         params['predictors'][p_count])       # (B, Ns, 2)
            score = pred_score[:, :, 0]
            num_keep = int(init_n * token_ratio[p_count])
            keep_policy = jnp.argsort(-score, axis=1)[:, :num_keep]           # descending
            cls_policy = jnp.zeros((B, 1), keep_policy.dtype)
            now_policy = jnp.concatenate([cls_policy, keep_policy + 1], axis=1)
            # TODO(synk): fuse this gather into the next block via scalar-prefetch row
            #             gather (PrefetchScalarGridSpec + pl.Element) to avoid the HBM
            #             round trip of the pruned token tensor.
            xt = batch_index_select(xt, now_policy)
            prev_decision = batch_index_select(prev_decision, keep_policy)
            xt = block_apply(xt, params['blocks'][idx], num_heads)
            p_count += 1
        else:
            xt = block_apply(xt, params['blocks'][idx], num_heads)

    cls_tok = xt[:, 0, :]                                           # (B, E) — cls rows only
    return head_apply(cls_tok, params['norm_g'], params['norm_b'],
                      params['head_w'], params['head_b'])


# ------------------------------------------------------------------------------ main
if __name__ == "__main__":
    # Small-but-faithful config: img_size/patch_size fixed at 224/16 (hard-coded in the
    # module: PatchEmbed(img_size=224) and init_n = 14*14*num_frames); embed_dim, depth,
    # heads, classes reduced.
    B, NUM_FRAMES = 2, 1
    IMG, PS, IN_CH = 224, 16, 3
    EMBED, DEPTH, HEADS, MLP_RATIO, NUM_CLASSES = 32, 6, 2, 4.0, 10
    NUM_PATCHES = (IMG // PS) * (IMG // PS)                         # 196

    key = jax.random.PRNGKey(0)
    kx, kp = jax.random.split(key)
    x = jax.random.normal(kx, (B * NUM_FRAMES, IN_CH, IMG, IMG), jnp.float32)

    params = init_params(kp, embed_dim=EMBED, depth=DEPTH, mlp_ratio=MLP_RATIO,
                         num_classes=NUM_CLASSES, in_chans=IN_CH, patch_size=PS,
                         num_patches=NUM_PATCHES, num_frames=NUM_FRAMES, num_pred=3)

    logits = vit_prune_forward(x, params, num_frames=NUM_FRAMES, patch_size=PS,
                               num_heads=HEADS, depth=DEPTH, pruning_loc=(1, 3, 5))
    logits = jax.block_until_ready(logits)
    assert logits.shape == (B, NUM_CLASSES), logits.shape
    assert bool(jnp.all(jnp.isfinite(logits)))
    print("KERNEL_OK")
</pallas_src>

<mosaic_0001>
module attributes {stable_mosaic.version = 11 : i64} {
  func.func @patch_embed_kernel(%arg0: i32, %arg1: memref<56x768xbf16, #tpu.memory_space<vmem>>, %arg2: memref<768x32xbf16, #tpu.memory_space<vmem>>, %arg3: memref<1x32xf32, #tpu.memory_space<vmem>>, %arg4: memref<56x32xbf16, #tpu.memory_space<vmem>>) attributes {dimension_semantics = [#tpu.dimension_semantics<parallel>], iteration_bounds = array<i64: 7>, scalar_prefetch = 0 : i64, scratch_operands = 0 : i64, tpu.core_type = #tpu.core_type<tc>, window_params = [{transform_indices = @transform_0, window_bounds = array<i64: 56, 768>}, {pipeline_mode = #tpu.pipeline_mode<synchronous>, transform_indices = @transform_1, window_bounds = array<i64: 768, 32>}, {pipeline_mode = #tpu.pipeline_mode<synchronous>, transform_indices = @transform_2, window_bounds = array<i64: 1, 32>}, {transform_indices = @transform_3, window_bounds = array<i64: 56, 32>}]} {
    %c0 = arith.constant 0 : index
    %c0_0 = arith.constant 0 : index
    %0 = vector.load %arg1[%c0, %c0_0] : memref<56x768xbf16, #tpu.memory_space<vmem>>, vector<56x768xbf16>
    %c0_1 = arith.constant 0 : index
    %c0_2 = arith.constant 0 : index
    %1 = vector.load %arg2[%c0_1, %c0_2] : memref<768x32xbf16, #tpu.memory_space<vmem>>, vector<768x32xbf16>
    %cst = arith.constant dense<0.000000e+00> : vector<56x32xf32>
    %2 = tpu.matmul %0, %1, %cst {dimension_numbers = #tpu.dot_dimension_numbers<[1], [0], [0], [1], [0, 0, 1, 1], [], []>} : vector<56x768xbf16>, vector<768x32xbf16>, vector<56x32xf32> -> vector<56x32xf32>
    %c0_3 = arith.constant 0 : index
    %c0_4 = arith.constant 0 : index
    %3 = vector.load %arg3[%c0_3, %c0_4] : memref<1x32xf32, #tpu.memory_space<vmem>>, vector<1x32xf32>
    %4 = vector.broadcast %3 : vector<1x32xf32> to vector<56x32xf32>
    %5 = arith.addf %2, %4 : vector<56x32xf32>
    %6 = arith.truncf %5 : vector<56x32xf32> to vector<56x32xbf16>
    %c0_5 = arith.constant 0 : index
    %c0_6 = arith.constant 0 : index
    %7 = vector.load %arg4[%c0_5, %c0_6] : memref<56x32xbf16, #tpu.memory_space<vmem>>, vector<56x32xbf16>
    tpu.vector_store %arg4[%c0_5, %c0_6], %6 {strides = array<i32>} : memref<56x32xbf16, #tpu.memory_space<vmem>>, vector<56x32xbf16>,
    return
  }
  func.func @transform_0(%arg0: i32) -> (i32, i32) {
    %c0_i32 = arith.constant 0 : i32
    %c0_i32_0 = arith.constant 0 : i32
    return %arg0, %c0_i32 : i32, i32
  }
  func.func @transform_1(%arg0: i32) -> (i32, i32) {
    %c0_i32 = arith.constant 0 : i32
    %c0_i32_0 = arith.constant 0 : i32
    %c0_i32_1 = arith.constant 0 : i32
    return %c0_i32, %c0_i32_0 : i32, i32
  }
  func.func @transform_2(%arg0: i32) -> (i32, i32) {
    %c0_i32 = arith.constant 0 : i32
    %c0_i32_0 = arith.constant 0 : i32
    %c0_i32_1 = arith.constant 0 : i32
    return %c0_i32, %c0_i32_0 : i32, i32
  }
  func.func @transform_3(%arg0: i32) -> (i32, i32) {
    %c0_i32 = arith.constant 0 : i32
    %c0_i32_0 = arith.constant 0 : i32
    return %arg0, %c0_i32 : i32, i32
  }
}

</mosaic_0001>

<llo_original>
// kernel: tpu_custom_call.1
$region0: #{tpu_custom_call.1}
  #allocation0 [shape = 'u32[]', space=smem, size = 0x4, offset = 0x4, fixed_abs, tag = 'smem constant byte address 0x4 - core index']
  #allocation1 [shape = 'u32[144,128]{1,0:T(1,128)}', space=vmem, size = 0x12000, scoped, tag = 'internal scratch']
  %s0 = inlined_call_operand.hbm [shape: bf16[392,768], index: 0, kind: input, shape index: {}]
  %s1 = inlined_call_operand.vmem [shape: bf16[768,32], index: 1, kind: input, shape index: {}]
  %s2 = inlined_call_operand.vmem [shape: f32[1,32], index: 2, kind: input, shape index: {}]
  %s3 = inlined_call_operand.vmem [shape: bf16[392,32], index: 3, kind: output, shape index: {}]
  %s4 = sld [smem:[#allocation0]]
  $region49: #{tpu_custom_call.1} parent=0
    _
  %s6 = ssub.s32 1, %s4
  %s7 = scalar_select 0, %s6, %s4
  $region1: #{tpu_custom_call.1} parent=0
    #allocation2 [shape = 'u8[172032]{0}', space=vmem, size = 0x2a000, scoped, tag = 'input window, operand 0']
    #allocation3 [shape = 's32[2]{0}', space=sflag, size = 0x8, scoped, tag = 'scoped memory for tpu_custom_call.1']
    %8 = vsyncpa [#allocation3], 0
    %s9 = scalar_lea.sflag [#allocation3], 1
    %10 = vsyncpa %s9, 0
    loop: start=0, step=1, limit=9
    $region2: #{tpu_custom_call.1} parent=1 // loop_pre_header
      _
    $region3: #{tpu_custom_call.1} parent=1 // loop_header
      %s12 = sphi 0, %s16
      %p13 = scmp.ge.s32.totalorder %s12, 9
      %s22 = sphi 0, %s24
      %s25 = sphi 0, %s22
      %s26 = sphi 0, %s25
      %s42 = sphi 0, %s26
      %s46 = sphi 0, %s46
      %s48 = sphi 0, %s46
      %s49 = sphi 0, %s48
      %s63 = sphi 0, %s49
      %s67 = sphi 0, %s67
      %s69 = sphi 0, %s67
      %s70 = sphi 0, %s69
      %s84 = sphi 0, %s70
      %s90 = sphi 0, %s92
      %s93 = sphi 0, %s90
      %s94 = sphi 0, %s93
      %s110 = sphi 0, %s94
    $region4: #{tpu_custom_call.1} parent=1 // loop_header_branch
      %15 = sbr.rel (%p13) target = $region8
    $region5: #{tpu_custom_call.1} parent=1 // loop_body
      %s17 = ssub.s32 %s12, 1
      %s18 = ssub.s32 %s12, 2
      %s19 = sadd.s32 %s12, 1
      %s20 = ssub.s32 %s12, %s19
      %p21 = scmp.eq.s32.totalorder %s20, 0
      %s23 = sadd.s32 %s22, 1
      %s24 = scalar_select %p21, %s22, %s23
      %p27 = pneg %p21
      %p28 = scmp.eq.s32.totalorder %s12, 6
      %p29 = por %p27, %p28
      %p30 = scmp.ne.s32.totalorder %s22, %s25
      %p31 = scmp.eq.s32.totalorder %s12, 0
      %p32 = por %p30, %p31
      %p33 = scmp.ne.s32.totalorder %s22, %s25
      %p34 = scmp.eq.s32.totalorder %s17, 6
      %p35 = por %p33, %p34
      %p36 = scmp.ne.s32.totalorder %s25, %s26
      %p37 = scmp.eq.s32.totalorder %s17, 0
      %p38 = por %p36, %p37
      %p39 = scmp.ne.s32.totalorder %s25, %s26
      %p40 = scmp.eq.s32.totalorder %s18, 6
      %p41 = por %p39, %p40
      %p43 = scmp.ne.s32.totalorder %s26, %s42
      %p44 = scmp.eq.s32.totalorder %s18, 0
      %p45 = por %p43, %p44
      %s47 = sadd.s32 %s46, 1
      %p50 = scmp.eq.s32.totalorder %s12, 6
      %p51 = scmp.ne.s32.totalorder %s46, %s48
      %p52 = scmp.eq.s32.totalorder %s12, 0
      %p53 = por %p51, %p52
      %p54 = scmp.ne.s32.totalorder %s46, %s48
      %p55 = scmp.eq.s32.totalorder %s17, 6
      %p56 = por %p54, %p55
      %p57 = scmp.ne.s32.totalorder %s48, %s49
      %p58 = scmp.eq.s32.totalorder %s17, 0
      %p59 = por %p57, %p58
      %p60 = scmp.ne.s32.totalorder %s48, %s49
      %p61 = scmp.eq.s32.totalorder %s18, 6
      %p62 = por %p60, %p61
      %p64 = scmp.ne.s32.totalorder %s49, %s63
      %p65 = scmp.eq.s32.totalorder %s18, 0
      %p66 = por %p64, %p65
      %s68 = sadd.s32 %s67, 1
      %p71 = scmp.eq.s32.totalorder %s12, 6
      %p72 = scmp.ne.s32.totalorder %s67, %s69
      %p73 = scmp.eq.s32.totalorder %s12, 0
      %p74 = por %p72, %p73
      %p75 = scmp.ne.s32.totalorder %s67, %s69
      %p76 = scmp.eq.s32.totalorder %s17, 6
      %p77 = por %p75, %p76
      %p78 = scmp.ne.s32.totalorder %s69, %s70
      %p79 = scmp.eq.s32.totalorder %s17, 0
      %p80 = por %p78, %p79
      %p81 = scmp.ne.s32.totalorder %s69, %s70
      %p82 = scmp.eq.s32.totalorder %s18, 6
      %p83 = por %p81, %p82
      %p85 = scmp.ne.s32.totalorder %s70, %s84
      %p86 = scmp.eq.s32.totalorder %s18, 0
      %p87 = por %p85, %p86
      %s88 = ssub.s32 %s12, %s19
      %p89 = scmp.eq.s32.totalorder %s88, 0
      %s91 = sadd.s32 %s90, 1
      %s92 = scalar_select %p89, %s90, %s91
      %p95 = pneg %p89
      %p96 = scmp.eq.s32.totalorder %s12, 6
      %p97 = por %p95, %p96
      %p98 = scmp.ne.s32.totalorder %s90, %s93
      %p99 = scmp.eq.s32.totalorder %s12, 0
      %p100 = por %p98, %p99
      %p101 = scmp.ne.s32.totalorder %s90, %s93
      %p102 = scmp.eq.s32.totalorder %s17, 6
      %p103 = por %p101, %p102
      %p104 = scmp.ne.s32.totalorder %s93, %s94
      %p105 = scmp.eq.s32.totalorder %s17, 0
      %p106 = por %p104, %p105
      %p107 = scmp.ne.s32.totalorder %s93, %s94
      %p108 = scmp.eq.s32.totalorder %s18, 6
      %p109 = por %p107, %p108
      %p111 = scmp.ne.s32.totalorder %s94, %s110
      %p112 = scmp.eq.s32.totalorder %s18, 0
      %p113 = por %p111, %p112
      %p114 = scmp.le.s32.totalorder 1, %s12
      %p115 = scmp.lt.s32.totalorder %s12, 8
      %p116 = pnand %p114, %p115
      %p117 = pneg %p116
      // Predicated region
      $region9: #{tpu_custom_call.1} parent=5 // pred_check
        _
      $region10: #{tpu_custom_call.1} parent=5 // pred_check_branch
        %119 = sbr.rel (%p116) target = $region12
      $region11: #{tpu_custom_call.1} parent=5 // pred_region
        %s120 = ssub.s32 %s12, 1
        // Predicated region
        $region13: #{tpu_custom_call.1} parent=11 // pred_check
          %p121 = pneg %p59
        $region14: #{tpu_custom_call.1} parent=11 // pred_check_branch
          %123 = sbr.rel (%p121) target = $region16
        $region15: #{tpu_custom_call.1} parent=11 // pred_region
          _
        $region16: #{tpu_custom_call.1} parent=11 // pred_fallthru
          _
        // Predicated region
        $region17: #{tpu_custom_call.1} parent=11 // pred_check
          %p124 = pneg %p80
        $region18: #{tpu_custom_call.1} parent=11 // pred_check_branch
          %126 = sbr.rel (%p124) target = $region20
        $region19: #{tpu_custom_call.1} parent=11 // pred_region
          _
        $region20: #{tpu_custom_call.1} parent=11 // pred_fallthru
          _
      $region12: #{tpu_custom_call.1} parent=5 // pred_fallthru
        _
      %p127 = scmp.lt.s32.totalorder %s12, 7
      // Predicated region
      $region21: #{tpu_custom_call.1} parent=5 // pred_check
        %p128 = pneg %p127
      $region22: #{tpu_custom_call.1} parent=5 // pred_check_branch
        %130 = sbr.rel (%p128) target = $region24
      $region23: #{tpu_custom_call.1} parent=5 // pred_region
        // Predicated region
        $region25: #{tpu_custom_call.1} parent=23 // pred_check
          %p131 = pneg %p32
        $region26: #{tpu_custom_call.1} parent=23 // pred_check_branch
          %133 = sbr.rel (%p131) target = $region28
        $region27: #{tpu_custom_call.1} parent=23 // pred_region
          %s134 = sand.u32 %s22, 1
          %s135 = scalar_lea.sflag [#allocation3], %s134
          %s136 = sand.u32 %s22, 1
          %s137 = smul.addr %s136, 168
          %s138 = scalar_lea.vmem [#allocation2], %s137
          %s139 = smul.u32 7, %s12
          %s141 = ssub.s32 2688, 2688
          %142 = vsyncadd %s135, %s141
          %s143 = smul.addr %s139, 6
          %s144 = smul.addr %s143, 64
          %s145 = scalar_lea.hbm %s0, %s144
          %s146 = sshll.u32 %s138, 4
          %s147 = int_to_ptr.vmem [resolvable:$true] %s146
          %152 = dma.hbm_to_vmem [thread:$0]  %s145, 2688, %s147, %s135, 384, 384, 24
        $region28: #{tpu_custom_call.1} parent=23 // pred_fallthru
          _
      $region24: #{tpu_custom_call.1} parent=5 // pred_fallthru
        _
      %p153 = scmp.le.s32.totalorder 1, %s12
      %p154 = scmp.lt.s32.totalorder %s12, 8
      %p155 = pnand %p153, %p154
      %p156 = pneg %p155
      // Predicated region
      $region29: #{tpu_custom_call.1} parent=5 // pred_check
        _
      $region30: #{tpu_custom_call.1} parent=5 // pred_check_branch
        %158 = sbr.rel (%p155) target = $region32
      $region31: #{tpu_custom_call.1} parent=5 // pred_region
        %s159 = ssub.s32 %s12, 1
        %s160 = sand.u32 %s25, 1
        %s161 = scalar_lea.sflag [#allocation3], %s160
        %s162 = sand.u32 %s25, 1
        %s163 = smul.addr %s162, 168
        %s164 = scalar_lea.vmem [#allocation2], %s163
        // Predicated region
        $region33: #{tpu_custom_call.1} parent=31 // pred_check
          %p165 = pneg %p38
        $region34: #{tpu_custom_call.1} parent=31 // pred_check_branch
          %167 = sbr.rel (%p165) target = $region36
        $region35: #{tpu_custom_call.1} parent=31 // pred_region
          %168 = dma.done %s161, 2688
        $region36: #{tpu_custom_call.1} parent=31 // pred_fallthru
          _
        %s169 = sand.u32 %s25, 1
        %s170 = scalar_lea.sflag [#allocation3], %s169
        %s171 = sand.u32 %s25, 1
        %s172 = smul.addr %s171, 168
        %s173 = scalar_lea.vmem [#allocation2], %s172
        %p174 = pneg %p38
        %p175 = pneg %p35
        %p176 = pneg %p59
        %p177 = pneg %p56
        %p178 = pneg %p80
        %p179 = pneg %p77
        %p180 = pneg %p106
        %p181 = pneg %p103
        %s182 = smul.u32 7, %s17
        %p183 = scmp.lt.s32.totalorder %s182, 48
        %s184 = scalar_select %p183, %s182, 48
        %s185 = smul.addr %s184, 4
        %s186 = scalar_lea.vmem %s3, %s185
        %s187 = smul.u32 7, %s17
        %s188 = smul.u32 7, %s17
        %p189 = scmp.lt.s32.totalorder %s188, 48
        %s190 = scalar_select %p189, %s188, 48
        %s191 = smul.addr %s190, 4
        %s192 = scalar_lea.vmem %s3, %s191
        %s193 = smul.u32 7, %s17
        %v195 = vld [vmem:[%s164] sm:$0xff]
        %v196 = vld [vmem:[%s164 + $0x8] sm:$0xff]
        %v197 = vld [vmem:[%s164 + $0x10] sm:$0xff]
        %v198 = vld [vmem:[%s164 + $0x18] sm:$0xff]
        %v199 = vld [vmem:[%s164 + $0x20] sm:$0xff]
        %v200 = vld [vmem:[%s164 + $0x28] sm:$0xff]
        %v201 = vld [vmem:[%s164 + $0x30] sm:$0xff]
        %v202 = vld [vmem:[%s164 + $0x38] sm:$0xff]
        %v203 = vld [vmem:[%s164 + $0x40] sm:$0xff]
        %v204 = vld [vmem:[%s164 + $0x48] sm:$0xff]
        %v205 = vld [vmem:[%s164 + $0x50] sm:$0xff]
        %v206 = vld [vmem:[%s164 + $0x58] sm:$0xff]
        %v207 = vld [vmem:[%s164 + $0x60] sm:$0xff]
        %v208 = vld [vmem:[%s164 + $0x68] sm:$0xff]
        %v209 = vld [vmem:[%s164 + $0x70] sm:$0xff]
        %v210 = vld [vmem:[%s164 + $0x78] sm:$0xff]
        %v211 = vld [vmem:[%s164 + $0x80] sm:$0xff]
        %v212 = vld [vmem:[%s164 + $0x88] sm:$0xff]
        %v213 = vld [vmem:[%s164 + $0x90] sm:$0xff]
        %v214 = vld [vmem:[%s164 + $0x98] sm:$0xff]
        %v215 = vld [vmem:[%s164 + $0xa0] sm:$0xff]
        %v216 = vld [vmem:[%s1] sm:$0xf]
        %v217 = vld [vmem:[%s1 + $0x4] sm:$0xf]
        %v218 = vld [vmem:[%s1 + $0x8] sm:$0xf]
        %v219 = vld [vmem:[%s1 + $0xc] sm:$0xf]
        %v220 = vld [vmem:[%s1 + $0x10] sm:$0xf]
        %v221 = vld [vmem:[%s1 + $0x14] sm:$0xf]
        %v222 = vld [vmem:[%s1 + $0x18] sm:$0xf]
        %v223 = vld [vmem:[%s1 + $0x1c] sm:$0xf]
        %v224 = vld [vmem:[%s1 + $0x20] sm:$0xf]
        %v225 = vld [vmem:[%s1 + $0x24] sm:$0xf]
        %v226 = vld [vmem:[%s1 + $0x28] sm:$0xf]
        %v227 = vld [vmem:[%s1 + $0x2c] sm:$0xf]
        %v228 = vld [vmem:[%s1 + $0x30] sm:$0xf]
        %v229 = vld [vmem:[%s1 + $0x34] sm:$0xf]
        %v230 = vld [vmem:[%s1 + $0x38] sm:$0xf]
        %v231 = vld [vmem:[%s1 + $0x3c] sm:$0xf]
        %v232 = vld [vmem:[%s1 + $0x40] sm:$0xf]
        %v233 = vld [vmem:[%s1 + $0x44] sm:$0xf]
        %v234 = vld [vmem:[%s1 + $0x48] sm:$0xf]
        %v235 = vld [vmem:[%s1 + $0x4c] sm:$0xf]
        %v236 = vld [vmem:[%s1 + $0x50] sm:$0xf]
        %v237 = vld [vmem:[%s1 + $0x54] sm:$0xf]
        %v238 = vld [vmem:[%s1 + $0x58] sm:$0xf]
        %v239 = vld [vmem:[%s1 + $0x5c] sm:$0xf]
        %v240 = vld [vmem:[%s1 + $0x60] sm:$0xf]
        %v241 = vld [vmem:[%s1 + $0x64] sm:$0xf]
        %v242 = vld [vmem:[%s1 + $0x68] sm:$0xf]
        %v243 = vld [vmem:[%s1 + $0x6c] sm:$0xf]
        %v244 = vld [vmem:[%s1 + $0x70] sm:$0xf]
        %v245 = vld [vmem:[%s1 + $0x74] sm:$0xf]
        %v246 = vld [vmem:[%s1 + $0x78] sm:$0xf]
        %v247 = vld [vmem:[%s1 + $0x7c] sm:$0xf]
        %v248 = vld [vmem:[%s1 + $0x80] sm:$0xf]
        %v249 = vld [vmem:[%s1 + $0x84] sm:$0xf]
        %v250 = vld [vmem:[%s1 + $0x88] sm:$0xf]
        %v251 = vld [vmem:[%s1 + $0x8c] sm:$0xf]
        %v252 = vld [vmem:[%s1 + $0x90] sm:$0xf]
        %v253 = vld [vmem:[%s1 + $0x94] sm:$0xf]
        %v254 = vld [vmem:[%s1 + $0x98] sm:$0xf]
        %v255 = vld [vmem:[%s1 + $0x9c] sm:$0xf]
        %v256 = vld [vmem:[%s1 + $0xa0] sm:$0xf]
        %v257 = vld [vmem:[%s1 + $0xa4] sm:$0xf]
        %v258 = vld [vmem:[%s1 + $0xa8] sm:$0xf]
        %v259 = vld [vmem:[%s1 + $0xac] sm:$0xf]
        %v260 = vld [vmem:[%s1 + $0xb0] sm:$0xf]
        %v261 = vld [vmem:[%s1 + $0xb4] sm:$0xf]
        %v262 = vld [vmem:[%s1 + $0xb8] sm:$0xf]
        %v263 = vld [vmem:[%s1 + $0xbc] sm:$0xf]
        %v264 = vld [vmem:[%s1 + $0xc0] sm:$0xf]
        %v265 = vld [vmem:[%s1 + $0xc4] sm:$0xf]
        %v266 = vld [vmem:[%s1 + $0xc8] sm:$0xf]
        %v267 = vld [vmem:[%s1 + $0xcc] sm:$0xf]
        %v268 = vld [vmem:[%s1 + $0xd0] sm:$0xf]
        %v269 = vld [vmem:[%s1 + $0xd4] sm:$0xf]
        %v270 = vld [vmem:[%s1 + $0xd8] sm:$0xf]
        %v271 = vld [vmem:[%s1 + $0xdc] sm:$0xf]
        %v272 = vld [vmem:[%s1 + $0xe0] sm:$0xf]
        %v273 = vld [vmem:[%s1 + $0xe4] sm:$0xf]
        %v274 = vld [vmem:[%s1 + $0xe8] sm:$0xf]
        %v275 = vld [vmem:[%s1 + $0xec] sm:$0xf]
        %v276 = vld [vmem:[%s1 + $0xf0] sm:$0xf]
        %v277 = vld [vmem:[%s1 + $0xf4] sm:$0xf]
        %v278 = vld [vmem:[%s1 + $0xf8] sm:$0xf]
        %v279 = vld [vmem:[%s1 + $0xfc] sm:$0xf]
        %v280 = vld [vmem:[%s1 + $0x100] sm:$0xf]
        %v281 = vld [vmem:[%s1 + $0x104] sm:$0xf]
        %v282 = vld [vmem:[%s1 + $0x108] sm:$0xf]
        %v283 = vld [vmem:[%s1 + $0x10c] sm:$0xf]
        %v284 = vld [vmem:[%s1 + $0x110] sm:$0xf]
        %v285 = vld [vmem:[%s1 + $0x114] sm:$0xf]
        %v286 = vld [vmem:[%s1 + $0x118] sm:$0xf]
        %v287 = vld [vmem:[%s1 + $0x11c] sm:$0xf]
        %v288 = vld [vmem:[%s1 + $0x120] sm:$0xf]
        %v289 = vld [vmem:[%s1 + $0x124] sm:$0xf]
        %v290 = vld [vmem:[%s1 + $0x128] sm:$0xf]
        %v291 = vld [vmem:[%s1 + $0x12c] sm:$0xf]
        %v292 = vld [vmem:[%s1 + $0x130] sm:$0xf]
        %v293 = vld [vmem:[%s1 + $0x134] sm:$0xf]
        %v294 = vld [vmem:[%s1 + $0x138] sm:$0xf]
        %v295 = vld [vmem:[%s1 + $0x13c] sm:$0xf]
        %v296 = vld [vmem:[%s1 + $0x140] sm:$0xf]
        %v297 = vld [vmem:[%s1 + $0x144] sm:$0xf]
        %v298 = vld [vmem:[%s1 + $0x148] sm:$0xf]
        %v299 = vld [vmem:[%s1 + $0x14c] sm:$0xf]
        %v300 = vld [vmem:[%s1 + $0x150] sm:$0xf]
        %v301 = vld [vmem:[%s1 + $0x154] sm:$0xf]
        %v302 = vld [vmem:[%s1 + $0x158] sm:$0xf]
        %v303 = vld [vmem:[%s1 + $0x15c] sm:$0xf]
        %v304 = vld [vmem:[%s1 + $0x160] sm:$0xf]
        %v305 = vld [vmem:[%s1 + $0x164] sm:$0xf]
        %v306 = vld [vmem:[%s1 + $0x168] sm:$0xf]
        %v307 = vld [vmem:[%s1 + $0x16c] sm:$0xf]
        %v308 = vld [vmem:[%s1 + $0x170] sm:$0xf]
        %v309 = vld [vmem:[%s1 + $0x174] sm:$0xf]
        %v310 = vld [vmem:[%s1 + $0x178] sm:$0xf]
        %v311 = vld [vmem:[%s1 + $0x17c] sm:$0xf]
        %v312 = vld [vmem:[%s2] sm:$0x1]
        %v314 = vlaneseq
        %v315 = vshrl.u32 %v314, 7
        %v316 = vsub.s32 0, %v315
        %v317 = vrot.slane %v312, %v316
        %v340 = vunpack.c.l.b16 %v195
        %v341 = vunpack.c.h.b16 %v195
        %v342 = vunpack.c.l.b16 %v196
        %v343 = vunpack.c.h.b16 %v196
        %v344 = vunpack.c.l.b16 %v197
        %v345 = vunpack.c.h.b16 %v197
        %v346 = vunpack.c.l.b16 %v198
        %v347 = vunpack.c.h.b16 %v198
        %v348 = vunpack.c.l.b16 %v199
        %v349 = vunpack.c.h.b16 %v199
        %v350 = vunpack.c.l.b16 %v200
        %v351 = vunpack.c.h.b16 %v200
        %v352 = vunpack.c.l.b16 %v201
        %v353 = vunpack.c.h.b16 %v201
        %v354 = vunpack.c.l.b16 %v202
        %v355 = vunpack.c.h.b16 %v202
        %v356 = vunpack.c.l.b16 %v203
        %v357 = vunpack.c.h.b16 %v203
        %v358 = vunpack.c.l.b16 %v204
        %v359 = vunpack.c.h.b16 %v204
        %v360 = vunpack.c.l.b16 %v205
        %v361 = vunpack.c.h.b16 %v205
        %v362 = vunpack.c.l.b16 %v206
        %v363 = vunpack.c.h.b16 %v206
        %v364 = vunpack.c.l.b16 %v207
        %v365 = vunpack.c.h.b16 %v207
        %v366 = vunpack.c.l.b16 %v208
        %v367 = vunpack.c.h.b16 %v208
        %v368 = vunpack.c.l.b16 %v209
        %v369 = vunpack.c.h.b16 %v209
        %v370 = vunpack.c.l.b16 %v210
        %v371 = vunpack.c.h.b16 %v210
        %v372 = vunpack.c.l.b16 %v211
        %v373 = vunpack.c.h.b16 %v211
        %v374 = vunpack.c.l.b16 %v212
        %v375 = vunpack.c.h.b16 %v212
        %v376 = vunpack.c.l.b16 %v213
        %v377 = vunpack.c.h.b16 %v213
        %v378 = vunpack.c.l.b16 %v214
        %v379 = vunpack.c.h.b16 %v214
        %v380 = vunpack.c.l.b16 %v215
        %v381 = vunpack.c.h.b16 %v215
        %v382 = vpack.c.b16 %v346, %v340
        %v383 = vpack.c.b16 %v347, %v341
        %v384 = vpack.c.b16 %v348, %v342
        %v385 = vpack.c.b16 %v349, %v343
        %v386 = vpack.c.b16 %v350, %v344
        %v387 = vpack.c.b16 %v351, %v345
        %v388 = vpack.c.b16 %v358, %v352
        %v389 = vpack.c.b16 %v359, %v353
        %v390 = vpack.c.b16 %v360, %v354
        %v391 = vpack.c.b16 %v361, %v355
        %v392 = vpack.c.b16 %v362, %v356
        %v393 = vpack.c.b16 %v363, %v357
        %v394 = vpack.c.b16 %v370, %v364
        %v395 = vpack.c.b16 %v371, %v365
        %v396 = vpack.c.b16 %v372, %v366
        %v397 = vpack.c.b16 %v373, %v367
        %v398 = vpack.c.b16 %v374, %v368
        %v399 = vpack.c.b16 %v375, %v369
        %v400 = vpack.c.b16 %v376, %v376
        %v401 = vpack.c.b16 %v377, %v377
        %v402 = vpack.c.b16 %v378, %v378
        %v403 = vpack.c.b16 %v379, %v379
        %v404 = vpack.c.b16 %v380, %v380
        %v405 = vpack.c.b16 %v381, %v381
        %v526 = vunpack.c.l.b16 %v216
        %v527 = vunpack.c.l.b16 %v217
        %v528 = vunpack.c.l.b16 %v218
        %v529 = vunpack.c.l.b16 %v219
        %v530 = vunpack.c.l.b16 %v220
        %v531 = vunpack.c.l.b16 %v221
        %v532 = vunpack.c.l.b16 %v222
        %v533 = vunpack.c.l.b16 %v223
        %v534 = vunpack.c.l.b16 %v224
        %v535 = vunpack.c.l.b16 %v225
        %v536 = vunpack.c.l.b16 %v226
        %v537 = vunpack.c.l.b16 %v227
        %v538 = vunpack.c.l.b16 %v228
        %v539 = vunpack.c.l.b16 %v229
        %v540 = vunpack.c.l.b16 %v230
        %v541 = vunpack.c.l.b16 %v231
        %v542 = vunpack.c.l.b16 %v232
        %v543 = vunpack.c.l.b16 %v233
        %v544 = vunpack.c.l.b16 %v234
        %v545 = vunpack.c.l.b16 %v235
        %v546 = vunpack.c.l.b16 %v236
        %v547 = vunpack.c.l.b16 %v237
        %v548 = vunpack.c.l.b16 %v238
        %v549 = vunpack.c.l.b16 %v239
        %v550 = vunpack.c.l.b16 %v240
        %v551 = vunpack.c.l.b16 %v241
        %v552 = vunpack.c.l.b16 %v242
        %v553 = vunpack.c.l.b16 %v243
        %v554 = vunpack.c.l.b16 %v244
        %v555 = vunpack.c.l.b16 %v245
        %v556 = vunpack.c.l.b16 %v246
        %v557 = vunpack.c.l.b16 %v247
        %v558 = vunpack.c.l.b16 %v248
        %v559 = vunpack.c.l.b16 %v249
        %v560 = vunpack.c.l.b16 %v250
        %v561 = vunpack.c.l.b16 %v251
        %v562 = vunpack.c.l.b16 %v252
        %v563 = vunpack.c.l.b16 %v253
        %v564 = vunpack.c.l.b16 %v254
        %v565 = vunpack.c.l.b16 %v255
        %v566 = vunpack.c.l.b16 %v256
        %v567 = vunpack.c.l.b16 %v257
        %v568 = vunpack.c.l.b16 %v258
        %v569 = vunpack.c.l.b16 %v259
        %v570 = vunpack.c.l.b16 %v260
        %v571 = vunpack.c.l.b16 %v261
        %v572 = vunpack.c.l.b16 %v262
        %v573 = vunpack.c.l.b16 %v263
        %v574 = vunpack.c.l.b16 %v264
        %v575 = vunpack.c.l.b16 %v265
        %v576 = vunpack.c.l.b16 %v266
        %v577 = vunpack.c.l.b16 %v267
        %v578 = vunpack.c.l.b16 %v268
        %v579 = vunpack.c.l.b16 %v269
        %v580 = vunpack.c.l.b16 %v270
        %v581 = vunpack.c.l.b16 %v271
        %v582 = vunpack.c.l.b16 %v272
        %v583 = vunpack.c.l.b16 %v273
        %v584 = vunpack.c.l.b16 %v274
        %v585 = vunpack.c.l.b16 %v275
        %v586 = vunpack.c.l.b16 %v276
        %v587 = vunpack.c.l.b16 %v277
        %v588 = vunpack.c.l.b16 %v278
        %v589 = vunpack.c.l.b16 %v279
        %v590 = vunpack.c.l.b16 %v280
        %v591 = vunpack.c.l.b16 %v281
        %v592 = vunpack.c.l.b16 %v282
        %v593 = vunpack.c.l.b16 %v283
        %v594 = vunpack.c.l.b16 %v284
        %v595 = vunpack.c.l.b16 %v285
        %v596 = vunpack.c.l.b16 %v286
        %v597 = vunpack.c.l.b16 %v287
        %v598 = vunpack.c.l.b16 %v288
        %v599 = vunpack.c.l.b16 %v289
        %v600 = vunpack.c.l.b16 %v290
        %v601 = vunpack.c.l.b16 %v291
        %v602 = vunpack.c.l.b16 %v292
        %v603 = vunpack.c.l.b16 %v293
        %v604 = vunpack.c.l.b16 %v294
        %v605 = vunpack.c.l.b16 %v295
        %v606 = vunpack.c.l.b16 %v296
        %v607 = vunpack.c.l.b16 %v297
        %v608 = vunpack.c.l.b16 %v298
        %v609 = vunpack.c.l.b16 %v299
        %v610 = vunpack.c.l.b16 %v300
        %v611 = vunpack.c.l.b16 %v301
        %v612 = vunpack.c.l.b16 %v302
        %v613 = vunpack.c.l.b16 %v303
        %v614 = vunpack.c.l.b16 %v304
        %v615 = vunpack.c.l.b16 %v305
        %v616 = vunpack.c.l.b16 %v306
        %v617 = vunpack.c.l.b16 %v307
        %v618 = vunpack.c.l.b16 %v308
        %v619 = vunpack.c.l.b16 %v309
        %v620 = vunpack.c.l.b16 %v310
        %v621 = vunpack.c.l.b16 %v311
        %v622 = vpack.c.b16 %v527, %v526
        %v623 = vpack.c.b16 %v529, %v528
        %v624 = vpack.c.b16 %v531, %v530
        %v625 = vpack.c.b16 %v533, %v532
        %v626 = vpack.c.b16 %v535, %v534
        %v627 = vpack.c.b16 %v537, %v536
        %v628 = vpack.c.b16 %v539, %v538
        %v629 = vpack.c.b16 %v541, %v540
        %v630 = vpack.c.b16 %v543, %v542
        %v631 = vpack.c.b16 %v545, %v544
        %v632 = vpack.c.b16 %v547, %v546
        %v633 = vpack.c.b16 %v549, %v548
        %v634 = vpack.c.b16 %v551, %v550
        %v635 = vpack.c.b16 %v553, %v552
        %v636 = vpack.c.b16 %v555, %v554
        %v637 = vpack.c.b16 %v557, %v556
        %v638 = vpack.c.b16 %v559, %v558
        %v639 = vpack.c.b16 %v561, %v560
        %v640 = vpack.c.b16 %v563, %v562
        %v641 = vpack.c.b16 %v565, %v564
        %v642 = vpack.c.b16 %v567, %v566
        %v643 = vpack.c.b16 %v569, %v568
        %v644 = vpack.c.b16 %v571, %v570
        %v645 = vpack.c.b16 %v573, %v572
        %v646 = vpack.c.b16 %v575, %v574
        %v647 = vpack.c.b16 %v577, %v576
        %v648 = vpack.c.b16 %v579, %v578
        %v649 = vpack.c.b16 %v581, %v580
        %v650 = vpack.c.b16 %v583, %v582
        %v651 = vpack.c.b16 %v585, %v584
        %v652 = vpack.c.b16 %v587, %v586
        %v653 = vpack.c.b16 %v589, %v588
        %v654 = vpack.c.b16 %v591, %v590
        %v655 = vpack.c.b16 %v593, %v592
        %v656 = vpack.c.b16 %v595, %v594
        %v657 = vpack.c.b16 %v597, %v596
        %v658 = vpack.c.b16 %v599, %v598
        %v659 = vpack.c.b16 %v601, %v600
        %v660 = vpack.c.b16 %v603, %v602
        %v661 = vpack.c.b16 %v605, %v604
        %v662 = vpack.c.b16 %v607, %v606
        %v663 = vpack.c.b16 %v609, %v608
        %v664 = vpack.c.b16 %v611, %v610
        %v665 = vpack.c.b16 %v613, %v612
        %v666 = vpack.c.b16 %v615, %v614
        %v667 = vpack.c.b16 %v617, %v616
        %v668 = vpack.c.b16 %v619, %v618
        %v669 = vpack.c.b16 %v621, %v620
        %718 = vmatprep.subr.bf16.mxu0 0
        %719 = vmatpush1.bf16.msra.mxu0 %v622
        %720 = vmatprep.subr.bf16.mxu0 0
        %721 = vmatpush1.bf16.msra.mxu0 %v623
        %722 = vmatprep.subr.bf16.mxu0 0
        %723 = vmatpush1.bf16.msra.mxu0 %v624
        %724 = vmatprep.subr.bf16.mxu0 0
        %725 = vmatpush1.bf16.msra.mxu0 %v625
        %726 = vmatprep.subr.bf16.mxu0 0
        %727 = vmatpush1.bf16.msra.mxu0 %v626
        %728 = vmatprep.subr.bf16.mxu0 0
        %729 = vmatpush1.bf16.msra.mxu0 %v627
        %730 = vmatprep.subr.bf16.mxu0 0
        %731 = vmatpush1.bf16.msra.mxu0 %v628
        %732 = vmatprep.subr.bf16.mxu0 0
        %733 = vmatpush1.bf16.msra.mxu0 %v629
        %734 = vmatprep.subr.bf16.mxu0 0
        %735 = vmatpush1.bf16.msra.mxu0 %v630
        %736 = vmatprep.subr.bf16.mxu0 0
        %737 = vmatpush1.bf16.msra.mxu0 %v631
        %738 = vmatprep.subr.bf16.mxu0 0
        %739 = vmatpush1.bf16.msra.mxu0 %v632
        %740 = vmatprep.subr.bf16.mxu0 0
        %741 = vmatpush1.bf16.msra.mxu0 %v633
        %742 = vmatprep.subr.bf16.mxu0 0
        %743 = vmatpush1.bf16.msra.mxu0 %v634
        %744 = vmatprep.subr.bf16.mxu0 0
        %745 = vmatpush1.bf16.msra.mxu0 %v635
        %746 = vmatprep.subr.bf16.mxu0 0
        %747 = vmatpush1.bf16.msra.mxu0 %v636
        %748 = vmatprep.subr.bf16.mxu0 0
        %749 = vmatpush1.bf16.msra.mxu0 %v637
        %750 = vmatprep.mubr.bf16.mxu0 %v383
        %751 = vmatmul.mubr.bf16.gmra.mrb[0].mxu0 %v382
        %v752 = vpop.f32.mrb[0].mxu0
        %v753 = vadd.f32 %v317, %v752
        %v754 = vpop.f32.mrb[0].mxu0
        %v755 = vpop.f32.mrb[0].mxu0
        %v756 = vadd.f32 %v317, %v755
        %v757 = vpop.f32.mrb[0].mxu0
        %758 = vmatprep.mubr.bf16.mxu0 %v389
        %759 = vmatmul.mubr.bf16.gmra.mrb[0].mxu0 %v388
        %v760 = vpop.f32.mrb[0].mxu0
        %v761 = vadd.f32 %v317, %v760
        %v762 = vpop.f32.mrb[0].mxu0
        %v763 = vpop.f32.mrb[0].mxu0
        %v764 = vadd.f32 %v317, %v763
        %v765 = vpop.f32.mrb[0].mxu0
        %766 = vmatprep.mubr.bf16.mxu0 %v395
        %767 = vmatmul.mubr.bf16.gmra.mrb[0].mxu0 %v394
        %v768 = vpop.f32.mrb[0].mxu0
        %v769 = vadd.f32 %v317, %v768
        %v770 = vpop.f32.mrb[0].mxu0
        %v771 = vpop.f32.mrb[0].mxu0
        %v772 = vadd.f32 %v317, %v771
        %v773 = vpop.f32.mrb[0].mxu0
        %774 = vmatprep.mubr.bf16.mxu0 %v401
        %775 = vmatmul.mubr.bf16.gmra.mrb[0].mxu0 %v400
        %v776 = vpop.f32.mrb[0].mxu0
        %v777 = vadd.f32 %v317, %v776
        %v778 = vpop.f32.mrb[0].mxu0
        %v779 = vpop.f32.mrb[0].mxu0
        %v780 = vpop.f32.mrb[0].mxu0
        %781 = vdwg.mxu0
        %782 = vmatprep.subr.bf16.mxu0 0
        %783 = vmatpush1.bf16.msra.mxu0 %v638
        %784 = vmatprep.subr.bf16.mxu0 0
        %785 = vmatpush1.bf16.msra.mxu0 %v639
        %786 = vmatprep.subr.bf16.mxu0 0
        %787 = vmatpush1.bf16.msra.mxu0 %v640
        %788 = vmatprep.subr.bf16.mxu0 0
        %789 = vmatpush1.bf16.msra.mxu0 %v641
        %790 = vmatprep.subr.bf16.mxu0 0
        %791 = vmatpush1.bf16.msra.mxu0 %v642
        %792 = vmatprep.subr.bf16.mxu0 0
        %793 = vmatpush1.bf16.msra.mxu0 %v643
        %794 = vmatprep.subr.bf16.mxu0 0
        %795 = vmatpush1.bf16.msra.mxu0 %v644
        %796 = vmatprep.subr.bf16.mxu0 0
        %797 = vmatpush1.bf16.msra.mxu0 %v645
        %798 = vmatprep.subr.bf16.mxu0 0
        %799 = vmatpush1.bf16.msra.mxu0 %v646
        %800 = vmatprep.subr.bf16.mxu0 0
        %801 = vmatpush1.bf16.msra.mxu0 %v647
        %802 = vmatprep.subr.bf16.mxu0 0
        %803 = vmatpush1.bf16.msra.mxu0 %v648
        %804 = vmatprep.subr.bf16.mxu0 0
        %805 = vmatpush1.bf16.msra.mxu0 %v649
        %806 = vmatprep.subr.bf16.mxu0 0
        %807 = vmatpush1.bf16.msra.mxu0 %v650
        %808 = vmatprep.subr.bf16.mxu0 0
        %809 = vmatpush1.bf16.msra.mxu0 %v651
        %810 = vmatprep.subr.bf16.mxu0 0
        %811 = vmatpush1.bf16.msra.mxu0 %v652
        %812 = vmatprep.subr.bf16.mxu0 0
        %813 = vmatpush1.bf16.msra.mxu0 %v653
        %814 = vmatprep.mubr.bf16.mxu0 %v385
        %815 = vmatmul.mubr.bf16.gmra.mrb[0].mxu0 %v384
        %v816 = vpop.f32.mrb[0].mxu0
        %v817 = vadd.f32 %v753, %v816
        %v818 = vpop.f32.mrb[0].mxu0
        %v819 = vpop.f32.mrb[0].mxu0
        %v820 = vadd.f32 %v756, %v819
        %v821 = vpop.f32.mrb[0].mxu0
        %822 = vmatprep.mubr.bf16.mxu0 %v391
        %823 = vmatmul.mubr.bf16.gmra.mrb[0].mxu0 %v390
        %v824 = vpop.f32.mrb[0].mxu0
        %v825 = vadd.f32 %v761, %v824
        %v826 = vpop.f32.mrb[0].mxu0
        %v827 = vpop.f32.mrb[0].mxu0
        %v828 = vadd.f32 %v764, %v827
        %v829 = vpop.f32.mrb[0].mxu0
        %830 = vmatprep.mubr.bf16.mxu0 %v397
        %831 = vmatmul.mubr.bf16.gmra.mrb[0].mxu0 %v396
        %v832 = vpop.f32.mrb[0].mxu0
        %v833 = vadd.f32 %v769, %v832
        %v834 = vpop.f32.mrb[0].mxu0
        %v835 = vpop.f32.mrb[0].mxu0
        %v836 = vadd.f32 %v772, %v835
        %v837 = vpop.f32.mrb[0].mxu0
        %838 = vmatprep.mubr.bf16.mxu0 %v403
        %839 = vmatmul.mubr.bf16.gmra.mrb[0].mxu0 %v402
        %v840 = vpop.f32.mrb[0].mxu0
        %v841 = vadd.f32 %v777, %v840
        %v842 = vpop.f32.mrb[0].mxu0
        %v843 = vpop.f32.mrb[0].mxu0
        %v844 = vpop.f32.mrb[0].mxu0
        %845 = vdwg.mxu0
        %846 = vmatprep.subr.bf16.mxu0 0
        %847 = vmatpush1.bf16.msra.mxu0 %v654
        %848 = vmatprep.subr.bf16.mxu0 0
        %849 = vmatpush1.bf16.msra.mxu0 %v655
        %850 = vmatprep.subr.bf16.mxu0 0
        %851 = vmatpush1.bf16.msra.mxu0 %v656
        %852 = vmatprep.subr.bf16.mxu0 0
        %853 = vmatpush1.bf16.msra.mxu0 %v657
        %854 = vmatprep.subr.bf16.mxu0 0
        %855 = vmatpush1.bf16.msra.mxu0 %v658
        %856 = vmatprep.subr.bf16.mxu0 0
        %857 = vmatpush1.bf16.msra.mxu0 %v659
        %858 = vmatprep.subr.bf16.mxu0 0
        %859 = vmatpush1.bf16.msra.mxu0 %v660
        %860 = vmatprep.subr.bf16.mxu0 0
        %861 = vmatpush1.bf16.msra.mxu0 %v661
        %862 = vmatprep.subr.bf16.mxu0 0
        %863 = vmatpush1.bf16.msra.mxu0 %v662
        %864 = vmatprep.subr.bf16.mxu0 0
        %865 = vmatpush1.bf16.msra.mxu0 %v663
        %866 = vmatprep.subr.bf16.mxu0 0
        %867 = vmatpush1.bf16.msra.mxu0 %v664
        %868 = vmatprep.subr.bf16.mxu0 0
        %869 = vmatpush1.bf16.msra.mxu0 %v665
        %870 = vmatprep.subr.bf16.mxu0 0
        %871 = vmatpush1.bf16.msra.mxu0 %v666
        %872 = vmatprep.subr.bf16.mxu0 0
        %873 = vmatpush1.bf16.msra.mxu0 %v667
        %874 = vmatprep.subr.bf16.mxu0 0
        %875 = vmatpush1.bf16.msra.mxu0 %v668
        %876 = vmatprep.subr.bf16.mxu0 0
        %877 = vmatpush1.bf16.msra.mxu0 %v669
        %878 = vmatprep.mubr.bf16.mxu0 %v387
        %879 = vmatmul.mubr.bf16.gmra.mrb[0].mxu0 %v386
        %v880 = vpop.f32.mrb[0].mxu0
        %v881 = vadd.f32 %v817, %v880
        %v882 = vpop.f32.mrb[0].mxu0
        %v883 = vpop.f32.mrb[0].mxu0
        %v884 = vadd.f32 %v820, %v883
        %v885 = vpop.f32.mrb[0].mxu0
        %886 = vmatprep.mubr.bf16.mxu0 %v393
        %887 = vmatmul.mubr.bf16.gmra.mrb[0].mxu0 %v392
        %v888 = vpop.f32.mrb[0].mxu0
        %v889 = vadd.f32 %v825, %v888
        %v890 = vpop.f32.mrb[0].mxu0
        %v891 = vpop.f32.mrb[0].mxu0
        %v892 = vadd.f32 %v828, %v891
        %v893 = vpop.f32.mrb[0].mxu0
        %894 = vmatprep.mubr.bf16.mxu0 %v399
        %895 = vmatmul.mubr.bf16.gmra.mrb[0].mxu0 %v398
        %v896 = vpop.f32.mrb[0].mxu0
        %v897 = vadd.f32 %v833, %v896
        %v898 = vpop.f32.mrb[0].mxu0
        %v899 = vpop.f32.mrb[0].mxu0
        %v900 = vadd.f32 %v836, %v899
        %v901 = vpop.f32.mrb[0].mxu0
        %902 = vmatprep.mubr.bf16.mxu0 %v405
        %903 = vmatmul.mubr.bf16.gmra.mrb[0].mxu0 %v404
        %v904 = vpop.f32.mrb[0].mxu0
        %v905 = vadd.f32 %v841, %v904
        %v906 = vpop.f32.mrb[0].mxu0
        %v907 = vpop.f32.mrb[0].mxu0
        %v908 = vpop.f32.mrb[0].mxu0
        %909 = vdwg.mxu0
        %v910 = vpack.c.bf16 %v884, %v881
        %v911 = vpack.c.bf16 %v892, %v889
        %v912 = vpack.c.bf16 %v900, %v897
        %v913 = vpack.c.bf16 %v905, %v905
        %v918 = vunpack.c.l.b16 %v910
        %v919 = vunpack.c.h.b16 %v910
        %v920 = vunpack.c.l.b16 %v911
        %v921 = vunpack.c.h.b16 %v911
        %v922 = vunpack.c.l.b16 %v912
        %v923 = vunpack.c.h.b16 %v912
        %v924 = vunpack.c.l.b16 %v913
        %v925 = vpack.c.b16 %v918, %v918
        %v926 = vpack.c.b16 %v919, %v919
        %v927 = vpack.c.b16 %v920, %v920
        %v928 = vpack.c.b16 %v921, %v921
        %v929 = vpack.c.b16 %v922, %v922
        %v930 = vpack.c.b16 %v923, %v923
        %v931 = vpack.c.b16 %v924, %v924
        %vm939 = vcmask 257024
        %940 = vst.msk [vmem:[%s192] sm:$0xf] %vm939, %v925
        %941 = vst.msk [vmem:[%s192 + $0x4] sm:$0xf] %vm939, %v926
        %942 = vst.msk [vmem:[%s192 + $0x8] sm:$0xf] %vm939, %v927
        %943 = vst.msk [vmem:[%s192 + $0xc] sm:$0xf] %vm939, %v928
        %944 = vst.msk [vmem:[%s192 + $0x10] sm:$0xf] %vm939, %v929
        %945 = vst.msk [vmem:[%s192 + $0x14] sm:$0xf] %vm939, %v930
        %946 = vst.msk [vmem:[%s192 + $0x18] sm:$0xf] %vm939, %v931
        %s947 = smul.u32 7, %s17
        %p948 = scmp.lt.s32.totalorder %s947, 48
        %s949 = scalar_select %p948, %s947, 48
        %s950 = smul.addr %s949, 4
        %s951 = scalar_lea.vmem %s3, %s950
        // Predicated region
        $region37: #{tpu_custom_call.1} parent=31 // pred_check
          %p952 = pneg %p103
        $region38: #{tpu_custom_call.1} parent=31 // pred_check_branch
          %954 = sbr.rel (%p952) target = $region40
        $region39: #{tpu_custom_call.1} parent=31 // pred_region
          %s955 = smul.u32 7, %s17
        $region40: #{tpu_custom_call.1} parent=31 // pred_fallthru
          _
      $region32: #{tpu_custom_call.1} parent=5 // pred_fallthru
        _
      %p956 = scmp.le.s32.totalorder 2, %s12
      // Predicated region
      $region41: #{tpu_custom_call.1} parent=5 // pred_check
        %p957 = pneg %p956
      $region42: #{tpu_custom_call.1} parent=5 // pred_check_branch
        %959 = sbr.rel (%p957) target = $region44
      $region43: #{tpu_custom_call.1} parent=5 // pred_region
        %s960 = ssub.s32 %s12, 2
        // Predicated region
        $region45: #{tpu_custom_call.1} parent=43 // pred_check
          %p961 = pneg %p109
        $region46: #{tpu_custom_call.1} parent=43 // pred_check_branch
          %963 = sbr.rel (%p961) target = $region48
        $region47: #{tpu_custom_call.1} parent=43 // pred_region
          %s964 = smul.u32 7, %s18
          %p965 = scmp.lt.s32.totalorder %s964, 48
          %s966 = scalar_select %p965, %s964, 48
          %s967 = smul.addr %s966, 4
          %s968 = scalar_lea.vmem %s3, %s967
        $region48: #{tpu_custom_call.1} parent=43 // pred_fallthru
          _
      $region44: #{tpu_custom_call.1} parent=5 // pred_fallthru
        _
    $region6: #{tpu_custom_call.1} parent=1 // loop_footer
      %s16 = sadd.s32 1, %s12
    $region7: #{tpu_custom_call.1} parent=1 // loop_footer_branch
      %11 = sbr.rel target = $region3
    $region8: #{tpu_custom_call.1} parent=1 // loop_exit
      _
    %969 = vsyncpa [#allocation3], 1
    %s970 = scalar_lea.sflag [#allocation3], 1
    %971 = vsyncpa %s970, 1

</llo_original>
